<compile_context>
chip_gen: v5e
topology: v5e:2x2
jax: 0.10.0
libtpu: 0.0.40
codegen_flags: <defaults>
</compile_context>

<pallas_src>
import jax
import jax.numpy as jnp
from jax.experimental import pallas as pl
from jax.experimental.pallas import tpu as pltpu


OUT_PAD = 128  # lane-dense padded width for the final (2-wide) output


def mlp_kernel(x_ref, w1_ref, b1_ref, w2_ref, b2_ref, w3_ref, b3_ref, o_ref):
    # x_ref is bf16 (TILE_N, F); weights are bf16; biases are f32.
    # Layer 1: Linear(F, 50) + ReLU   (MXU in bf16, f32 accumulate, f32 VPU ops)
    h1 = jnp.dot(x_ref[...], w1_ref[...], preferred_element_type=jnp.float32)
    h1 = jnp.maximum(h1 + b1_ref[...], 0.0)
    # Layer 2: Linear(50, 25) + ReLU
    h2 = jnp.dot(h1.astype(jnp.bfloat16), w2_ref[...],
                 preferred_element_type=jnp.float32)
    h2 = jnp.maximum(h2 + b2_ref[...], 0.0)
    # Layer 3: Linear(25, 2) padded to 128 lanes (use_bce=False -> 2 logits).
    # Lane-dense (TILE_N, 128) store; real logits live in columns [0, 2).
    o = jnp.dot(h2.astype(jnp.bfloat16), w3_ref[...],
                preferred_element_type=jnp.float32) + b3_ref[...]
    o_ref[...] = o.astype(o_ref.dtype)


def classifier_forward(x, params):
    """x: (N, F) float32. Returns squeezed logits, matching torch's .squeeze()."""
    w1, b1, w2, b2, w3, b3 = params
    N, F = x.shape
    h1_dim = w1.shape[1]
    h2_dim = w2.shape[1]
    out_dim = w3.shape[1]

    # --- batch tiling ----------------------------------------------------
    TILE_N = 512
    if N < TILE_N:
        TILE_N = ((N + 7) // 8) * 8          # sublane-aligned single block
    n_pad = ((N + TILE_N - 1) // TILE_N) * TILE_N
    if n_pad != N:
        x = jnp.pad(x, ((0, n_pad - N), (0, 0)))
    grid = (n_pad // TILE_N,)

    # --- dtype / padding of operands ------------------------------------
    xb = x.astype(jnp.bfloat16)                       # streamed HBM traffic -> bf16
    w1b = w1.astype(jnp.bfloat16)
    w2b = w2.astype(jnp.bfloat16)
    w3p = jnp.zeros((h2_dim, OUT_PAD), jnp.bfloat16).at[:, :out_dim].set(
        w3.astype(jnp.bfloat16))
    b1f = b1.astype(jnp.float32)
    b2f = b2.astype(jnp.float32)
    b3p = jnp.zeros((1, OUT_PAD), jnp.float32).at[:, :out_dim].set(
        b3.astype(jnp.float32))

    def resident(arr):
        # Whole array as one block, constant block index -> stays in VMEM
        # across all grid steps (no re-DMA of weights/biases).
        nd = arr.ndim
        return pl.BlockSpec(arr.shape, lambda i, _nd=nd: (0,) * _nd)

    flops = 2 * n_pad * (F * h1_dim + h1_dim * h2_dim + h2_dim * OUT_PAD)
    bytes_accessed = (
        n_pad * F * 2                      # x (bf16 in)
        + n_pad * OUT_PAD * 4              # padded output (f32)
        + (F * h1_dim + h1_dim * h2_dim + h2_dim * OUT_PAD) * 2   # weights
        + (h1_dim + h2_dim + OUT_PAD) * 4                          # biases
    )

    out = pl.pallas_call(
        mlp_kernel,
        out_shape=jax.ShapeDtypeStruct((n_pad, OUT_PAD), jnp.float32),
        grid=grid,
        in_specs=[
            pl.BlockSpec((TILE_N, F), lambda i: (i, 0)),   # streamed x tiles
            resident(w1b), resident(b1f),
            resident(w2b), resident(b2f),
            resident(w3p), resident(b3p),
        ],
        out_specs=pl.BlockSpec((TILE_N, OUT_PAD), lambda i: (i, 0)),
        compiler_params=pltpu.CompilerParams(
            # parallel batch axis -> shards across both TensorCores on v7x
            dimension_semantics=("parallel",),
            # explicit bound; blocks are tiny, but keeps v7x (64 MiB VMEM) safe
            vmem_limit_bytes=32 * 1024 * 1024,
        ),
        cost_estimate=pl.CostEstimate(
            flops=flops, transcendentals=0, bytes_accessed=bytes_accessed),
    )(xb, w1b, b1f, w2b, b2f, w3p, b3p)

    logits = out[:N, :out_dim]
    # torch: self.net(x).squeeze() -- drop size-1 dims (glue, not hot path).
    return jnp.squeeze(logits)


def init_params(key, in_features, hidden1=50, hidden2=25, out_features=2):
    """Deterministic synthetic init (PyTorch-Linear-like uniform bounds)."""
    ks = jax.random.split(key, 6)

    def linear(kw, kb, fan_in, fan_out):
        bound = 1.0 / jnp.sqrt(jnp.float32(fan_in))
        w = jax.random.uniform(kw, (fan_in, fan_out), jnp.float32, -bound, bound)
        b = jax.random.uniform(kb, (1, fan_out), jnp.float32, -bound, bound)
        return w, b

    w1, b1 = linear(ks[0], ks[1], in_features, hidden1)
    w2, b2 = linear(ks[2], ks[3], hidden1, hidden2)
    w3, b3 = linear(ks[4], ks[5], hidden2, out_features)
    return (w1, b1, w2, b2, w3, b3)


def _reference(x, params):
    """Pure-JAX reference with the same bf16-operand / f32-accumulate math."""
    w1, b1, w2, b2, w3, b3 = params
    xb = x.astype(jnp.bfloat16)
    h = jnp.dot(xb, w1.astype(jnp.bfloat16), preferred_element_type=jnp.float32)
    h = jnp.maximum(h + b1, 0.0)
    h = jnp.dot(h.astype(jnp.bfloat16), w2.astype(jnp.bfloat16),
                preferred_element_type=jnp.float32)
    h = jnp.maximum(h + b2, 0.0)
    o = jnp.dot(h.astype(jnp.bfloat16), w3.astype(jnp.bfloat16),
                preferred_element_type=jnp.float32) + b3
    return jnp.squeeze(o)


if __name__ == "__main__":
    key = jax.random.PRNGKey(0)
    k_x, k_p = jax.random.split(key)

    batch = 8
    in_features = 16  # features.shape[1] in the original script (synthetic choice)

    x = jax.random.normal(k_x, (batch, in_features), dtype=jnp.float32)
    params = init_params(k_p, in_features)

    logits = classifier_forward(x, params)
    jax.block_until_ready(logits)

    ref = _reference(x, params)
    assert logits.shape == ref.shape == (batch, 2), (logits.shape, ref.shape)
    assert jnp.allclose(logits, ref, atol=1e-2, rtol=1e-2), (
        jnp.max(jnp.abs(logits - ref)))

    # Loose sanity check against the full-f32 math as well.
    w1, b1, w2, b2, w3, b3 = params
    h = jnp.maximum(x @ w1 + b1, 0.0)
    h = jnp.maximum(h @ w2 + b2, 0.0)
    ref_f32 = jnp.squeeze(h @ w3 + b3)
    assert jnp.allclose(logits, ref_f32, atol=5e-2, rtol=5e-2)

    print("KERNEL_OK")
</pallas_src>

<mosaic_0001>
module attributes {stable_mosaic.version = 11 : i64} {
  func.func @mlp_kernel(%arg0: i32, %arg1: memref<8x16xbf16, #tpu.memory_space<vmem>>, %arg2: memref<16x50xbf16, #tpu.memory_space<vmem>>, %arg3: memref<1x50xf32, #tpu.memory_space<vmem>>, %arg4: memref<50x25xbf16, #tpu.memory_space<vmem>>, %arg5: memref<1x25xf32, #tpu.memory_space<vmem>>, %arg6: memref<25x128xbf16, #tpu.memory_space<vmem>>, %arg7: memref<1x128xf32, #tpu.memory_space<vmem>>, %arg8: memref<8x128xf32, #tpu.memory_space<vmem>>) attributes {dimension_semantics = [#tpu.dimension_semantics<parallel>], iteration_bounds = array<i64: 1>, scalar_prefetch = 0 : i64, scratch_operands = 0 : i64, tpu.core_type = #tpu.core_type<tc>, window_params = [{transform_indices = @transform_0, window_bounds = array<i64: 8, 16>}, {pipeline_mode = #tpu.pipeline_mode<synchronous>, transform_indices = @transform_1, window_bounds = array<i64: 16, 50>}, {pipeline_mode = #tpu.pipeline_mode<synchronous>, transform_indices = @transform_2, window_bounds = array<i64: 1, 50>}, {pipeline_mode = #tpu.pipeline_mode<synchronous>, transform_indices = @transform_3, window_bounds = array<i64: 50, 25>}, {pipeline_mode = #tpu.pipeline_mode<synchronous>, transform_indices = @transform_4, window_bounds = array<i64: 1, 25>}, {pipeline_mode = #tpu.pipeline_mode<synchronous>, transform_indices = @transform_5, window_bounds = array<i64: 25, 128>}, {pipeline_mode = #tpu.pipeline_mode<synchronous>, transform_indices = @transform_6, window_bounds = array<i64: 1, 128>}, {transform_indices = @transform_7, window_bounds = array<i64: 8, 128>}]} {
    %c0 = arith.constant 0 : index
    %c0_0 = arith.constant 0 : index
    %0 = vector.load %arg1[%c0, %c0_0] : memref<8x16xbf16, #tpu.memory_space<vmem>>, vector<8x16xbf16>
    %c0_1 = arith.constant 0 : index
    %c0_2 = arith.constant 0 : index
    %1 = vector.load %arg2[%c0_1, %c0_2] : memref<16x50xbf16, #tpu.memory_space<vmem>>, vector<16x50xbf16>
    %cst = arith.constant dense<0.000000e+00> : vector<8x50xf32>
    %2 = tpu.matmul %0, %1, %cst {dimension_numbers = #tpu.dot_dimension_numbers<[1], [0], [0], [1], [0, 0, 1, 1], [], []>} : vector<8x16xbf16>, vector<16x50xbf16>, vector<8x50xf32> -> vector<8x50xf32>
    %c0_3 = arith.constant 0 : index
    %c0_4 = arith.constant 0 : index
    %3 = vector.load %arg3[%c0_3, %c0_4] : memref<1x50xf32, #tpu.memory_space<vmem>>, vector<1x50xf32>
    %4 = vector.broadcast %3 : vector<1x50xf32> to vector<8x50xf32>
    %5 = arith.addf %2, %4 : vector<8x50xf32>
    %cst_5 = arith.constant 0.000000e+00 : f32
    %6 = vector.broadcast %cst_5 : f32 to vector<8x50xf32>
    %7 = arith.maximumf %5, %6 : vector<8x50xf32>
    %8 = arith.truncf %7 : vector<8x50xf32> to vector<8x50xbf16>
    %c0_6 = arith.constant 0 : index
    %c0_7 = arith.constant 0 : index
    %9 = vector.load %arg4[%c0_6, %c0_7] : memref<50x25xbf16, #tpu.memory_space<vmem>>, vector<50x25xbf16>
    %cst_8 = arith.constant dense<0.000000e+00> : vector<8x25xf32>
    %10 = tpu.matmul %8, %9, %cst_8 {dimension_numbers = #tpu.dot_dimension_numbers<[1], [0], [0], [1], [0, 0, 1, 1], [], []>} : vector<8x50xbf16>, vector<50x25xbf16>, vector<8x25xf32> -> vector<8x25xf32>
    %c0_9 = arith.constant 0 : index
    %c0_10 = arith.constant 0 : index
    %11 = vector.load %arg5[%c0_9, %c0_10] : memref<1x25xf32, #tpu.memory_space<vmem>>, vector<1x25xf32>
    %12 = vector.broadcast %11 : vector<1x25xf32> to vector<8x25xf32>
    %13 = arith.addf %10, %12 : vector<8x25xf32>
    %cst_11 = arith.constant 0.000000e+00 : f32
    %14 = vector.broadcast %cst_11 : f32 to vector<8x25xf32>
    %15 = arith.maximumf %13, %14 : vector<8x25xf32>
    %16 = arith.truncf %15 : vector<8x25xf32> to vector<8x25xbf16>
    %c0_12 = arith.constant 0 : index
    %c0_13 = arith.constant 0 : index
    %17 = vector.load %arg6[%c0_12, %c0_13] : memref<25x128xbf16, #tpu.memory_space<vmem>>, vector<25x128xbf16>
    %cst_14 = arith.constant dense<0.000000e+00> : vector<8x128xf32>
    %18 = tpu.matmul %16, %17, %cst_14 {dimension_numbers = #tpu.dot_dimension_numbers<[1], [0], [0], [1], [0, 0, 1, 1], [], []>} : vector<8x25xbf16>, vector<25x128xbf16>, vector<8x128xf32> -> vector<8x128xf32>
    %c0_15 = arith.constant 0 : index
    %c0_16 = arith.constant 0 : index
    %19 = vector.load %arg7[%c0_15, %c0_16] : memref<1x128xf32, #tpu.memory_space<vmem>>, vector<1x128xf32>
    %20 = vector.broadcast %19 : vector<1x128xf32> to vector<8x128xf32>
    %21 = arith.addf %18, %20 : vector<8x128xf32>
    %c0_17 = arith.constant 0 : index
    %c0_18 = arith.constant 0 : index
    %22 = vector.load %arg8[%c0_17, %c0_18] : memref<8x128xf32, #tpu.memory_space<vmem>>, vector<8x128xf32>
    tpu.vector_store %arg8[%c0_17, %c0_18], %21 {strides = array<i32>} : memref<8x128xf32, #tpu.memory_space<vmem>>, vector<8x128xf32>,
    return
  }
  func.func @transform_0(%arg0: i32) -> (i32, i32) {
    %c0_i32 = arith.constant 0 : i32
    %c0_i32_0 = arith.constant 0 : i32
    return %arg0, %c0_i32 : i32, i32
  }
  func.func @transform_1(%arg0: i32) -> (i32, i32) {
    %c0_i32 = arith.constant 0 : i32
    %c0_i32_0 = arith.constant 0 : i32
    %c0_i32_1 = arith.constant 0 : i32
    return %c0_i32, %c0_i32_0 : i32, i32
  }
  func.func @transform_2(%arg0: i32) -> (i32, i32) {
    %c0_i32 = arith.constant 0 : i32
    %c0_i32_0 = arith.constant 0 : i32
    %c0_i32_1 = arith.constant 0 : i32
    return %c0_i32, %c0_i32_0 : i32, i32
  }
  func.func @transform_3(%arg0: i32) -> (i32, i32) {
    %c0_i32 = arith.constant 0 : i32
    %c0_i32_0 = arith.constant 0 : i32
    %c0_i32_1 = arith.constant 0 : i32
    return %c0_i32, %c0_i32_0 : i32, i32
  }
  func.func @transform_4(%arg0: i32) -> (i32, i32) {
    %c0_i32 = arith.constant 0 : i32
    %c0_i32_0 = arith.constant 0 : i32
    %c0_i32_1 = arith.constant 0 : i32
    return %c0_i32, %c0_i32_0 : i32, i32
  }
  func.func @transform_5(%arg0: i32) -> (i32, i32) {
    %c0_i32 = arith.constant 0 : i32
    %c0_i32_0 = arith.constant 0 : i32
    %c0_i32_1 = arith.constant 0 : i32
    return %c0_i32, %c0_i32_0 : i32, i32
  }
  func.func @transform_6(%arg0: i32) -> (i32, i32) {
    %c0_i32 = arith.constant 0 : i32
    %c0_i32_0 = arith.constant 0 : i32
    %c0_i32_1 = arith.constant 0 : i32
    return %c0_i32, %c0_i32_0 : i32, i32
  }
  func.func @transform_7(%arg0: i32) -> (i32, i32) {
    %c0_i32 = arith.constant 0 : i32
    %c0_i32_0 = arith.constant 0 : i32
    return %arg0, %c0_i32 : i32, i32
  }
}

</mosaic_0001>

<llo_original>
// kernel: tpu_custom_call.1
$region0: #{tpu_custom_call.1}
  #allocation0 [shape = 'u32[]', space=smem, size = 0x4, offset = 0x4, fixed_abs, tag = 'smem constant byte address 0x4 - core index']
  #allocation1 [shape = 'u32[72,128]{1,0:T(1,128)}', space=vmem, size = 0x9000, scoped, tag = 'internal scratch']
  %s0 = inlined_call_operand.vmem [shape: bf16[8,16], index: 0, kind: input, shape index: {}]
  %s1 = inlined_call_operand.vmem [shape: bf16[16,50], index: 1, kind: input, shape index: {}]
  %s2 = inlined_call_operand.vmem [shape: f32[1,50], index: 2, kind: input, shape index: {}]
  %s3 = inlined_call_operand.vmem [shape: bf16[50,25], index: 3, kind: input, shape index: {}]
  %s4 = inlined_call_operand.vmem [shape: f32[1,25], index: 4, kind: input, shape index: {}]
  %s5 = inlined_call_operand.vmem [shape: bf16[25,128], index: 5, kind: input, shape index: {}]
  %s6 = inlined_call_operand.vmem [shape: f32[1,128], index: 6, kind: input, shape index: {}]
  %s7 = inlined_call_operand.hbm [shape: f32[8,128], index: 7, kind: output, shape index: {}]
  %s8 = sld [smem:[#allocation0]]
  $region38: #{tpu_custom_call.1} parent=0
    _
  %s10 = ssub.s32 1, %s8
  %s11 = scalar_select 0, %s10, %s8
  $region1: #{tpu_custom_call.1} parent=0
    #allocation2 [shape = 'u8[4096]{0}', space=vmem, size = 0x1000, scoped, tag = 'output window, operand 0, single buffered']
    #allocation3 [shape = 's32[1]{0}', space=sflag, size = 0x4, scoped, tag = 'scoped memory for tpu_custom_call.1']
    %12 = vsyncpa [#allocation3], 0
    // Predicated region
    $region2: #{tpu_custom_call.1} parent=1 // pred_check
      _
    $region3: #{tpu_custom_call.1} parent=1 // pred_check_branch
      %14 = sbr.rel (0) target = $region5
    $region4: #{tpu_custom_call.1} parent=1 // pred_region
      _
    $region5: #{tpu_custom_call.1} parent=1 // pred_fallthru
      _
    // Predicated region
    $region6: #{tpu_custom_call.1} parent=1 // pred_check
      _
    $region7: #{tpu_custom_call.1} parent=1 // pred_check_branch
      %16 = sbr.rel (0) target = $region9
    $region8: #{tpu_custom_call.1} parent=1 // pred_region
      _
    $region9: #{tpu_custom_call.1} parent=1 // pred_fallthru
      _
    // Predicated region
    $region10: #{tpu_custom_call.1} parent=1 // pred_check
      _
    $region11: #{tpu_custom_call.1} parent=1 // pred_check_branch
      %18 = sbr.rel (0) target = $region13
    $region12: #{tpu_custom_call.1} parent=1 // pred_region
      _
    $region13: #{tpu_custom_call.1} parent=1 // pred_fallthru
      _
    // Predicated region
    $region14: #{tpu_custom_call.1} parent=1 // pred_check
      _
    $region15: #{tpu_custom_call.1} parent=1 // pred_check_branch
      %20 = sbr.rel (0) target = $region17
    $region16: #{tpu_custom_call.1} parent=1 // pred_region
      _
    $region17: #{tpu_custom_call.1} parent=1 // pred_fallthru
      _
    // Predicated region
    $region18: #{tpu_custom_call.1} parent=1 // pred_check
      _
    $region19: #{tpu_custom_call.1} parent=1 // pred_check_branch
      %22 = sbr.rel (0) target = $region21
    $region20: #{tpu_custom_call.1} parent=1 // pred_region
      _
    $region21: #{tpu_custom_call.1} parent=1 // pred_fallthru
      _
    // Predicated region
    $region22: #{tpu_custom_call.1} parent=1 // pred_check
      _
    $region23: #{tpu_custom_call.1} parent=1 // pred_check_branch
      %24 = sbr.rel (0) target = $region25
    $region24: #{tpu_custom_call.1} parent=1 // pred_region
      _
    $region25: #{tpu_custom_call.1} parent=1 // pred_fallthru
      _
    // Predicated region
    $region26: #{tpu_custom_call.1} parent=1 // pred_check
      _
    $region27: #{tpu_custom_call.1} parent=1 // pred_check_branch
      %26 = sbr.rel (0) target = $region29
    $region28: #{tpu_custom_call.1} parent=1 // pred_region
      _
    $region29: #{tpu_custom_call.1} parent=1 // pred_fallthru
      _
    %v28 = vld [vmem:[%s0] sm:$0xf]
    %v29 = vld [vmem:[%s1] sm:$0xf]
    %v30 = vld [vmem:[%s1 + $0x4] sm:$0xf]
    %v31 = vld [vmem:[%s2] sm:$0x1]
    %v33 = vperm.slane %v31, 0
    %v37 = vunpack.c.l.b16 %v29
    %v38 = vunpack.c.l.b16 %v30
    %v39 = vpack.c.b16 %v38, %v37
    %vm41 = vcmask 130048
    %v43 = vsel %vm41, %v28, 0
    %45 = vmatpush.bf16.msra.mxu0 0
    %46 = vmatpush.bf16.msra.mxu0 0
    %47 = vmatpush.bf16.msra.mxu0 0
    %48 = vmatpush.bf16.msra.mxu0 0
    %49 = vmatpush.bf16.msra.mxu0 0
    %50 = vmatpush.bf16.msra.mxu0 0
    %51 = vmatpush.bf16.msra.mxu0 0
    %52 = vmatpush.bf16.msra.mxu0 %v39
    %53 = vmatmul.bf16.gmra.mxu0 %v43
    %v54 = vpop.f32.mrf.mxu0
    %v55 = vadd.f32 %v33, %v54
    %v56 = vpop.f32.mrf.mxu0
    %57 = vdwg.mxu0
    %v58 = vmax.f32 %v55, 0.0
    %v59 = vpack.c.bf16 %v58, %v58
    %v60 = vld [vmem:[%s3] sm:$0xf]
    %v61 = vld [vmem:[%s3 + $0x4] sm:$0xf]
    %v62 = vld [vmem:[%s3 + $0x8] sm:$0xf]
    %v63 = vld [vmem:[%s3 + $0xc] sm:$0xf]
    %v64 = vld [vmem:[%s3 + $0x10] sm:$0xf]
    %v65 = vld [vmem:[%s3 + $0x14] sm:$0xf]
    %v66 = vld [vmem:[%s3 + $0x18] sm:$0x1]
    %v67 = vld [vmem:[%s4] sm:$0x1]
    %v69 = vperm.slane %v67, 0
    %v78 = vunpack.c.l.b16 %v60
    %v79 = vunpack.c.l.b16 %v61
    %v80 = vunpack.c.l.b16 %v62
    %v81 = vunpack.c.l.b16 %v63
    %v82 = vunpack.c.l.b16 %v64
    %v83 = vunpack.c.l.b16 %v65
    %v84 = vunpack.c.l.b16 %v66
    %v85 = vpack.c.b16 %v79, %v78
    %v86 = vpack.c.b16 %v81, %v80
    %v87 = vpack.c.b16 %v83, %v82
    %v88 = vpack.c.b16 %v84, %v84
    %vm92 = vcmask 408576
    %v94 = vsel %vm92, %v59, 0
    %vm96 = vcmask 1040384
    %v98 = vsel %vm96, %v88, 0
    %100 = vmatpush.bf16.msra.mxu0 0
    %101 = vmatpush.bf16.msra.mxu0 0
    %102 = vmatpush.bf16.msra.mxu0 0
    %103 = vmatpush.bf16.msra.mxu0 0
    %104 = vmatpush.bf16.msra.mxu0 %v98
    %105 = vmatpush.bf16.msra.mxu0 %v87
    %106 = vmatpush.bf16.msra.mxu0 %v86
    %107 = vmatpush.bf16.msra.mxu0 %v85
    %108 = vmatmul.bf16.gmra.mxu0 %v94
    %v109 = vpop.f32.mrf.mxu0
    %v110 = vadd.f32 %v69, %v109
    %v111 = vpop.f32.mrf.mxu0
    %112 = vdwg.mxu0
    %v113 = vmax.f32 %v110, 0.0
    %v114 = vpack.c.bf16 %v113, %v113
    %v115 = vld [vmem:[%s5] sm:$0xf]
    %v116 = vld [vmem:[%s5 + $0x4] sm:$0xf]
    %v117 = vld [vmem:[%s5 + $0x8] sm:$0xf]
    %v118 = vld [vmem:[%s5 + $0xc] sm:$0x1]
    %v119 = vld [vmem:[%s6] sm:$0x1]
    %v121 = vperm.slane %v119, 0
    %v127 = vunpack.c.l.b16 %v115
    %v128 = vunpack.c.l.b16 %v116
    %v129 = vunpack.c.l.b16 %v117
    %v130 = vunpack.c.l.b16 %v118
    %v131 = vpack.c.b16 %v128, %v127
    %v132 = vpack.c.b16 %v130, %v129
    %vm134 = vcmask 203776
    %v136 = vsel %vm134, %v114, 0
    %vm138 = vcmask 1043456
    %vm139 = vcmask 1044480
    %v140 = vsel %vm138, 4294967295, 65535
    %v141 = vsel %vm139, %v140, 0
    %v143 = vand.u32 %v132, %v141
    %145 = vmatpush.bf16.msra.mxu0 0
    %146 = vmatpush.bf16.msra.mxu0 0
    %147 = vmatpush.bf16.msra.mxu0 0
    %148 = vmatpush.bf16.msra.mxu0 0
    %149 = vmatpush.bf16.msra.mxu0 0
    %150 = vmatpush.bf16.msra.mxu0 0
    %151 = vmatpush.bf16.msra.mxu0 %v143
    %152 = vmatpush.bf16.msra.mxu0 %v131
    %153 = vmatmul.bf16.gmra.mxu0 %v136
    %v154 = vpop.f32.mrf.mxu0
    %v155 = vadd.f32 %v121, %v154
    %v156 = vpop.f32.mrf.mxu0
    %157 = vdwg.mxu0
    %158 = vst [vmem:[#allocation2] sm:$0xff] %v155
    // Predicated region
    $region30: #{tpu_custom_call.1} parent=1 // pred_check
      _
    $region31: #{tpu_custom_call.1} parent=1 // pred_check_branch
      %160 = sbr.rel (0) target = $region33
    $region32: #{tpu_custom_call.1} parent=1 // pred_region
      %162 = vsyncadd [#allocation3], 0
      %s164 = sshll.u32 [#allocation2], 4
      %s165 = int_to_ptr.vmem [resolvable:$true] %s164
      %s166 = sshll.u32 %s7, 4
      %s167 = int_to_ptr.hbm [resolvable:$true] %s166
      %169 = dma.vmem_to_hbm [thread:$0]  %s165, 128, %s167, [#allocation3]
    $region33: #{tpu_custom_call.1} parent=1 // pred_fallthru
      _
    // Predicated region
    $region34: #{tpu_custom_call.1} parent=1 // pred_check
      _
    $region35: #{tpu_custom_call.1} parent=1 // pred_check_branch
      %171 = sbr.rel (0) target = $region37
    $region36: #{tpu_custom_call.1} parent=1 // pred_region
      %173 = dma.done [#allocation3], 128
    $region37: #{tpu_custom_call.1} parent=1 // pred_fallthru
      _
    %174 = vsyncpa [#allocation3], 1

</llo_original>
